<compile_context>
chip_gen: v7x
topology: tpu7x:2x2x1
jax: 0.10.0
libtpu: 0.0.40
codegen_flags: <defaults>
</compile_context>

<pallas_src>
import functools

import jax
import jax.numpy as jnp
from jax.experimental import pallas as pl
from jax.experimental.pallas import tpu as pltpu


def _round_up(v, m):
    return ((v + m - 1) // m) * m


def _swiglu_mlp_kernel(x_ref, w1g_ref, w1x_ref, w2_ref, gamma_p1_ref, o_ref,
                       *, depth, eps):
    compute_dtype = x_ref.dtype                 # MXU operand dtype (bf16-friendly)
    x = x_ref[...].astype(jnp.float32)          # (TM, dim) carried / accumulated in f32

    for d in range(depth):                      # depth is small & static -> unrolled
        residual = x
        xin = x.astype(compute_dtype)
        # gates dot first so sigmoid (EUP) overlaps the x_val dot (MXU).
        gates = jnp.dot(xin, w1g_ref[d], preferred_element_type=jnp.float32)
        x_val = jnp.dot(xin, w1x_ref[d], preferred_element_type=jnp.float32)
        h = (gates * jax.nn.sigmoid(gates)) * x_val          # F.silu(gates) * x_val
        x = jnp.dot(h.astype(compute_dtype), w2_ref[d],
                    preferred_element_type=jnp.float32) + residual

    # LayerNorm(dim, elementwise_affine=False) then * (gamma + 1.0)
    mean = jnp.mean(x, axis=-1, keepdims=True)
    var = jnp.mean((x - mean) ** 2, axis=-1, keepdims=True)
    xn = (x - mean) * jax.lax.rsqrt(var + eps)
    o_ref[...] = (xn * gamma_p1_ref[...].astype(jnp.float32)).astype(o_ref.dtype)


def memory_swiglu_mlp(x, w1_all, w2_all, gamma, *, eps=1e-5, block_tokens=512):
    """x: (B, N, dim); w1_all: (depth, dim, 2*dim_inner); w2_all: (depth, dim_inner, dim);
    gamma: (dim,).  Returns (B, N, dim)."""
    B, N, dim = x.shape
    depth, _, two_inner = w1_all.shape
    dim_inner = two_inner // 2
    tokens = B * N

    # Split w1 into its two halves once in the wrapper -> two lane-aligned dots
    # in the kernel (no in-kernel slice at lane offset dim_inner).
    w1x_all = w1_all[:, :, :dim_inner]          # (depth, dim, dim_inner)
    w1g_all = w1_all[:, :, dim_inner:]          # (depth, dim, dim_inner)

    # Precompute (gamma + 1.0) once.
    gamma_p1 = (gamma.astype(jnp.float32) + 1.0).reshape(1, dim)

    x2d = x.reshape(tokens, dim)

    # Token-axis tiling.  TM is a multiple of 8 (f32 sublane); 512 rows keeps the
    # f32 working set (x + two dim_inner-wide slabs + residual, double-buffered
    # x/out tiles + resident weights) comfortably inside v7x's 64 MiB VMEM.
    tm = min(block_tokens, _round_up(tokens, 8))
    tokens_pad = _round_up(tokens, tm)
    if tokens_pad != tokens:
        x2d = jnp.pad(x2d, ((0, tokens_pad - tokens), (0, 0)))

    grid = (tokens_pad // tm,)
    kernel = functools.partial(_swiglu_mlp_kernel, depth=depth, eps=eps)

    out2d = pl.pallas_call(
        kernel,
        out_shape=jax.ShapeDtypeStruct((tokens_pad, dim), x.dtype),
        grid=grid,
        in_specs=[
            pl.BlockSpec((tm, dim), lambda i: (i, 0)),                     # x tile
            pl.BlockSpec((depth, dim, dim_inner), lambda i: (0, 0, 0)),    # w1 gates (resident)
            pl.BlockSpec((depth, dim, dim_inner), lambda i: (0, 0, 0)),    # w1 x-half (resident)
            pl.BlockSpec((depth, dim_inner, dim), lambda i: (0, 0, 0)),    # w2 (resident)
            pl.BlockSpec((1, dim), lambda i: (0, 0)),                      # gamma+1 (resident)
        ],
        out_specs=pl.BlockSpec((tm, dim), lambda i: (i, 0)),
        compiler_params=pltpu.CompilerParams(
            dimension_semantics=("parallel",)),   # shards token grid across TCs on v7x
    )(x2d, w1g_all, w1x_all, w2_all, gamma_p1)

    return out2d[:tokens].reshape(B, N, dim)


def _xavier_uniform(key, shape, dtype=jnp.float32):
    fan_in, fan_out = shape[-2], shape[-1]
    bound = (6.0 / (fan_in + fan_out)) ** 0.5
    return jax.random.uniform(key, shape, dtype, minval=-bound, maxval=bound)


if __name__ == "__main__":
    # Module config (small, consistent with the PyTorch __init__).
    dim = 64
    depth = 2
    expansion_factor = 4.0
    dim_inner = int(dim * expansion_factor * 2 / 3)   # 170

    batch, seq = 2, 8

    key = jax.random.PRNGKey(0)
    kx, *kws = jax.random.split(key, 1 + 2 * depth)

    x = jax.random.normal(kx, (batch, seq, dim), dtype=jnp.float32)

    w1_list, w2_list = [], []
    for d in range(depth):
        w1_list.append(_xavier_uniform(kws[2 * d], (dim, dim_inner * 2)))
        w2_list.append(_xavier_uniform(kws[2 * d + 1], (dim_inner, dim)))
    w1_all = jnp.stack(w1_list, axis=0)       # (depth, dim, 2*dim_inner)
    w2_all = jnp.stack(w2_list, axis=0)       # (depth, dim_inner, dim)
    gamma = jnp.zeros((dim,), dtype=jnp.float32)   # LayerNorm.gamma init = zeros

    out = memory_swiglu_mlp(x, w1_all, w2_all, gamma)
    jax.block_until_ready(out)

    # Pure-JAX reference check of the same math.
    def ref_forward(x, w1_all, w2_all, gamma):
        y = x
        for d in range(depth):
            residual = y
            h = y @ w1_all[d]
            x_val, gates = h[..., :dim_inner], h[..., dim_inner:]
            y = jax.nn.silu(gates) * x_val
            y = y @ w2_all[d] + residual
        mean = jnp.mean(y, axis=-1, keepdims=True)
        var = jnp.mean((y - mean) ** 2, axis=-1, keepdims=True)
        yn = (y - mean) / jnp.sqrt(var + 1e-5)
        return yn * (gamma + 1.0)

    ref = ref_forward(x, w1_all, w2_all, gamma)
    assert jnp.allclose(out, ref, atol=1e-4, rtol=1e-4), "mismatch vs reference"

    print("KERNEL_OK")
</pallas_src>

<mosaic_0001>
module attributes {stable_mosaic.version = 11 : i64} {
  func.func @_swiglu_mlp_kernel(%arg0: i32, %arg1: memref<16x64xf32, #tpu.memory_space<vmem>>, %arg2: memref<2x64x170xf32, #tpu.memory_space<vmem>>, %arg3: memref<2x64x170xf32, #tpu.memory_space<vmem>>, %arg4: memref<2x170x64xf32, #tpu.memory_space<vmem>>, %arg5: memref<1x64xf32, #tpu.memory_space<vmem>>, %arg6: memref<16x64xf32, #tpu.memory_space<vmem>>) attributes {dimension_semantics = [#tpu.dimension_semantics<parallel>], iteration_bounds = array<i64: 1>, scalar_prefetch = 0 : i64, scratch_operands = 0 : i64, tpu.core_type = #tpu.core_type<tc>, window_params = [{transform_indices = @transform_0, window_bounds = array<i64: 16, 64>}, {pipeline_mode = #tpu.pipeline_mode<synchronous>, transform_indices = @transform_1, window_bounds = array<i64: 2, 64, 170>}, {pipeline_mode = #tpu.pipeline_mode<synchronous>, transform_indices = @transform_2, window_bounds = array<i64: 2, 64, 170>}, {pipeline_mode = #tpu.pipeline_mode<synchronous>, transform_indices = @transform_3, window_bounds = array<i64: 2, 170, 64>}, {pipeline_mode = #tpu.pipeline_mode<synchronous>, transform_indices = @transform_4, window_bounds = array<i64: 1, 64>}, {transform_indices = @transform_5, window_bounds = array<i64: 16, 64>}]} {
    %c0 = arith.constant 0 : index
    %c0_0 = arith.constant 0 : index
    %0 = vector.load %arg1[%c0, %c0_0] : memref<16x64xf32, #tpu.memory_space<vmem>>, vector<16x64xf32>
    %c0_1 = arith.constant 0 : index
    %c0_2 = arith.constant 0 : index
    %c0_3 = arith.constant 0 : index
    %1 = vector.load %arg2[%c0_1, %c0_2, %c0_3] : memref<2x64x170xf32, #tpu.memory_space<vmem>>, vector<1x64x170xf32>
    %2 = vector.shape_cast %1 : vector<1x64x170xf32> to vector<64x170xf32>
    %cst = arith.constant dense<0.000000e+00> : vector<16x170xf32>
    %3 = tpu.matmul %0, %2, %cst {dimension_numbers = #tpu.dot_dimension_numbers<[1], [0], [0], [1], [0, 0, 1, 1], [], []>} : vector<16x64xf32>, vector<64x170xf32>, vector<16x170xf32> -> vector<16x170xf32>
    %c0_4 = arith.constant 0 : index
    %c0_5 = arith.constant 0 : index
    %c0_6 = arith.constant 0 : index
    %4 = vector.load %arg3[%c0_4, %c0_5, %c0_6] : memref<2x64x170xf32, #tpu.memory_space<vmem>>, vector<1x64x170xf32>
    %5 = vector.shape_cast %4 : vector<1x64x170xf32> to vector<64x170xf32>
    %cst_7 = arith.constant dense<0.000000e+00> : vector<16x170xf32>
    %6 = tpu.matmul %0, %5, %cst_7 {dimension_numbers = #tpu.dot_dimension_numbers<[1], [0], [0], [1], [0, 0, 1, 1], [], []>} : vector<16x64xf32>, vector<64x170xf32>, vector<16x170xf32> -> vector<16x170xf32>
    %7 = arith.negf %3 : vector<16x170xf32>
    %8 = math.exp %7 : vector<16x170xf32>
    %cst_8 = arith.constant 1.000000e+00 : f32
    %9 = vector.broadcast %cst_8 : f32 to vector<16x170xf32>
    %10 = arith.addf %9, %8 : vector<16x170xf32>
    %11 = arith.divf %9, %10 : vector<16x170xf32>
    %12 = arith.mulf %3, %11 : vector<16x170xf32>
    %13 = arith.mulf %12, %6 : vector<16x170xf32>
    %c0_9 = arith.constant 0 : index
    %c0_10 = arith.constant 0 : index
    %c0_11 = arith.constant 0 : index
    %14 = vector.load %arg4[%c0_9, %c0_10, %c0_11] : memref<2x170x64xf32, #tpu.memory_space<vmem>>, vector<1x170x64xf32>
    %15 = vector.shape_cast %14 : vector<1x170x64xf32> to vector<170x64xf32>
    %cst_12 = arith.constant dense<0.000000e+00> : vector<16x64xf32>
    %16 = tpu.matmul %13, %15, %cst_12 {dimension_numbers = #tpu.dot_dimension_numbers<[1], [0], [0], [1], [0, 0, 1, 1], [], []>} : vector<16x170xf32>, vector<170x64xf32>, vector<16x64xf32> -> vector<16x64xf32>
    %17 = arith.addf %16, %0 : vector<16x64xf32>
    %c1 = arith.constant 1 : index
    %c0_13 = arith.constant 0 : index
    %c0_14 = arith.constant 0 : index
    %18 = vector.load %arg2[%c1, %c0_13, %c0_14] : memref<2x64x170xf32, #tpu.memory_space<vmem>>, vector<1x64x170xf32>
    %19 = vector.shape_cast %18 : vector<1x64x170xf32> to vector<64x170xf32>
    %cst_15 = arith.constant dense<0.000000e+00> : vector<16x170xf32>
    %20 = tpu.matmul %17, %19, %cst_15 {dimension_numbers = #tpu.dot_dimension_numbers<[1], [0], [0], [1], [0, 0, 1, 1], [], []>} : vector<16x64xf32>, vector<64x170xf32>, vector<16x170xf32> -> vector<16x170xf32>
    %c1_16 = arith.constant 1 : index
    %c0_17 = arith.constant 0 : index
    %c0_18 = arith.constant 0 : index
    %21 = vector.load %arg3[%c1_16, %c0_17, %c0_18] : memref<2x64x170xf32, #tpu.memory_space<vmem>>, vector<1x64x170xf32>
    %22 = vector.shape_cast %21 : vector<1x64x170xf32> to vector<64x170xf32>
    %cst_19 = arith.constant dense<0.000000e+00> : vector<16x170xf32>
    %23 = tpu.matmul %17, %22, %cst_19 {dimension_numbers = #tpu.dot_dimension_numbers<[1], [0], [0], [1], [0, 0, 1, 1], [], []>} : vector<16x64xf32>, vector<64x170xf32>, vector<16x170xf32> -> vector<16x170xf32>
    %24 = arith.negf %20 : vector<16x170xf32>
    %25 = math.exp %24 : vector<16x170xf32>
    %cst_20 = arith.constant 1.000000e+00 : f32
    %26 = vector.broadcast %cst_20 : f32 to vector<16x170xf32>
    %27 = arith.addf %26, %25 : vector<16x170xf32>
    %28 = arith.divf %26, %27 : vector<16x170xf32>
    %29 = arith.mulf %20, %28 : vector<16x170xf32>
    %30 = arith.mulf %29, %23 : vector<16x170xf32>
    %c1_21 = arith.constant 1 : index
    %c0_22 = arith.constant 0 : index
    %c0_23 = arith.constant 0 : index
    %31 = vector.load %arg4[%c1_21, %c0_22, %c0_23] : memref<2x170x64xf32, #tpu.memory_space<vmem>>, vector<1x170x64xf32>
    %32 = vector.shape_cast %31 : vector<1x170x64xf32> to vector<170x64xf32>
    %cst_24 = arith.constant dense<0.000000e+00> : vector<16x64xf32>
    %33 = tpu.matmul %30, %32, %cst_24 {dimension_numbers = #tpu.dot_dimension_numbers<[1], [0], [0], [1], [0, 0, 1, 1], [], []>} : vector<16x170xf32>, vector<170x64xf32>, vector<16x64xf32> -> vector<16x64xf32>
    %34 = arith.addf %33, %17 : vector<16x64xf32>
    %cst_25 = arith.constant dense<0.000000e+00> : vector<16xf32>
    %35 = vector.multi_reduction <add>, %34, %cst_25 [1] : vector<16x64xf32> to vector<16xf32>
    %36 = vector.shape_cast %35 : vector<16xf32> to vector<16x1xf32>
    %cst_26 = arith.constant 6.400000e+01 : f32
    %37 = vector.broadcast %cst_26 : f32 to vector<16x1xf32>
    %38 = arith.divf %36, %37 : vector<16x1xf32>
    %39 = vector.broadcast %38 : vector<16x1xf32> to vector<16x64xf32>
    %40 = arith.subf %34, %39 : vector<16x64xf32>
    %41 = arith.mulf %40, %40 : vector<16x64xf32>
    %cst_27 = arith.constant dense<0.000000e+00> : vector<16xf32>
    %42 = vector.multi_reduction <add>, %41, %cst_27 [1] : vector<16x64xf32> to vector<16xf32>
    %43 = vector.shape_cast %42 : vector<16xf32> to vector<16x1xf32>
    %cst_28 = arith.constant 6.400000e+01 : f32
    %44 = vector.broadcast %cst_28 : f32 to vector<16x1xf32>
    %45 = arith.divf %43, %44 : vector<16x1xf32>
    %46 = vector.broadcast %38 : vector<16x1xf32> to vector<16x64xf32>
    %47 = arith.subf %34, %46 : vector<16x64xf32>
    %cst_29 = arith.constant 9.99999974E-6 : f32
    %48 = vector.broadcast %cst_29 : f32 to vector<16x1xf32>
    %49 = arith.addf %45, %48 : vector<16x1xf32>
    %50 = math.rsqrt %49 : vector<16x1xf32>
    %51 = vector.broadcast %50 : vector<16x1xf32> to vector<16x64xf32>
    %52 = arith.mulf %47, %51 : vector<16x64xf32>
    %c0_30 = arith.constant 0 : index
    %c0_31 = arith.constant 0 : index
    %53 = vector.load %arg5[%c0_30, %c0_31] : memref<1x64xf32, #tpu.memory_space<vmem>>, vector<1x64xf32>
    %54 = vector.broadcast %53 : vector<1x64xf32> to vector<16x64xf32>
    %55 = arith.mulf %52, %54 : vector<16x64xf32>
    %c0_32 = arith.constant 0 : index
    %c0_33 = arith.constant 0 : index
    %56 = vector.load %arg6[%c0_32, %c0_33] : memref<16x64xf32, #tpu.memory_space<vmem>>, vector<16x64xf32>
    tpu.vector_store %arg6[%c0_32, %c0_33], %55 {strides = array<i32>} : memref<16x64xf32, #tpu.memory_space<vmem>>, vector<16x64xf32>,
    return
  }
  func.func @transform_0(%arg0: i32) -> (i32, i32) {
    %c0_i32 = arith.constant 0 : i32
    %c0_i32_0 = arith.constant 0 : i32
    return %arg0, %c0_i32 : i32, i32
  }
  func.func @transform_1(%arg0: i32) -> (i32, i32, i32) {
    %c0_i32 = arith.constant 0 : i32
    %c0_i32_0 = arith.constant 0 : i32
    %c0_i32_1 = arith.constant 0 : i32
    %c0_i32_2 = arith.constant 0 : i32
    return %c0_i32, %c0_i32_0, %c0_i32_1 : i32, i32, i32
  }
  func.func @transform_2(%arg0: i32) -> (i32, i32, i32) {
    %c0_i32 = arith.constant 0 : i32
    %c0_i32_0 = arith.constant 0 : i32
    %c0_i32_1 = arith.constant 0 : i32
    %c0_i32_2 = arith.constant 0 : i32
    return %c0_i32, %c0_i32_0, %c0_i32_1 : i32, i32, i32
  }
  func.func @transform_3(%arg0: i32) -> (i32, i32, i32) {
    %c0_i32 = arith.constant 0 : i32
    %c0_i32_0 = arith.constant 0 : i32
    %c0_i32_1 = arith.constant 0 : i32
    %c0_i32_2 = arith.constant 0 : i32
    return %c0_i32, %c0_i32_0, %c0_i32_1 : i32, i32, i32
  }
  func.func @transform_4(%arg0: i32) -> (i32, i32) {
    %c0_i32 = arith.constant 0 : i32
    %c0_i32_0 = arith.constant 0 : i32
    %c0_i32_1 = arith.constant 0 : i32
    return %c0_i32, %c0_i32_0 : i32, i32
  }
  func.func @transform_5(%arg0: i32) -> (i32, i32) {
    %c0_i32 = arith.constant 0 : i32
    %c0_i32_0 = arith.constant 0 : i32
    return %arg0, %c0_i32 : i32, i32
  }
}

</mosaic_0001>

<llo_original>
// kernel: tpu_custom_call.1
$region0: #{tpu_custom_call.1}
  #allocation0 [shape = 'u32[]', space=smem, size = 0x4, offset = 0x4, fixed_abs, tag = 'smem constant byte address 0x4 - core index']
  #allocation1 [shape = 'u32[144,128]{1,0:T(1,128)}', space=vmem, size = 0x12000, scoped, tag = 'internal scratch']
  %s0 = inlined_call_operand.vmem [shape: f32[16,64], index: 0, kind: input, shape index: {}]
  %s1 = inlined_call_operand.vmem [shape: f32[2,64,170], index: 1, kind: input, shape index: {}]
  %s2 = inlined_call_operand.vmem [shape: f32[2,64,170], index: 2, kind: input, shape index: {}]
  %s3 = inlined_call_operand.vmem [shape: f32[2,170,64], index: 3, kind: input, shape index: {}]
  %s4 = inlined_call_operand.vmem [shape: f32[1,64], index: 4, kind: input, shape index: {}]
  %s5 = inlined_call_operand.hbm [shape: f32[16,64], index: 5, kind: output, shape index: {}]
  %s6 = sld [smem:[#allocation0]]
  $region30: #{tpu_custom_call.1} parent=0
    _
  %s8 = ssub.s32 1, %s6
  %s9 = scalar_select 0, %s8, %s6
  $region1: #{tpu_custom_call.1} parent=0
    #allocation2 [shape = 'u8[8192]{0}', space=vmem, size = 0x2000, scoped, tag = 'output window, operand 0, single buffered']
    #allocation3 [shape = 's32[1]{0}', space=sflag, size = 0x4, scoped, tag = 'scoped memory for tpu_custom_call.1']
    %10 = vsyncpa [#allocation3], 0
    // Predicated region
    $region2: #{tpu_custom_call.1} parent=1 // pred_check
      _
    $region3: #{tpu_custom_call.1} parent=1 // pred_check_branch
      %12 = sbr.rel (0) target = $region5
    $region4: #{tpu_custom_call.1} parent=1 // pred_region
      _
    $region5: #{tpu_custom_call.1} parent=1 // pred_fallthru
      _
    // Predicated region
    $region6: #{tpu_custom_call.1} parent=1 // pred_check
      _
    $region7: #{tpu_custom_call.1} parent=1 // pred_check_branch
      %14 = sbr.rel (0) target = $region9
    $region8: #{tpu_custom_call.1} parent=1 // pred_region
      _
    $region9: #{tpu_custom_call.1} parent=1 // pred_fallthru
      _
    // Predicated region
    $region10: #{tpu_custom_call.1} parent=1 // pred_check
      _
    $region11: #{tpu_custom_call.1} parent=1 // pred_check_branch
      %16 = sbr.rel (0) target = $region13
    $region12: #{tpu_custom_call.1} parent=1 // pred_region
      _
    $region13: #{tpu_custom_call.1} parent=1 // pred_fallthru
      _
    // Predicated region
    $region14: #{tpu_custom_call.1} parent=1 // pred_check
      _
    $region15: #{tpu_custom_call.1} parent=1 // pred_check_branch
      %18 = sbr.rel (0) target = $region17
    $region16: #{tpu_custom_call.1} parent=1 // pred_region
      _
    $region17: #{tpu_custom_call.1} parent=1 // pred_fallthru
      _
    // Predicated region
    $region18: #{tpu_custom_call.1} parent=1 // pred_check
      _
    $region19: #{tpu_custom_call.1} parent=1 // pred_check_branch
      %20 = sbr.rel (0) target = $region21
    $region20: #{tpu_custom_call.1} parent=1 // pred_region
      _
    $region21: #{tpu_custom_call.1} parent=1 // pred_fallthru
      _
    %v21 = vld [vmem:[%s0] sm:$0xff]
    %v22 = vld [vmem:[%s0 + $0x8] sm:$0xff]
    %v23 = vld [vmem:[%s1] sm:$0xff]
    %v24 = vld [vmem:[%s1 + $0x8] sm:$0xff]
    %v25 = vld [vmem:[%s1 + $0x10] sm:$0xff]
    %v26 = vld [vmem:[%s1 + $0x18] sm:$0xff]
    %v27 = vld [vmem:[%s1 + $0x20] sm:$0xff]
    %v28 = vld [vmem:[%s1 + $0x28] sm:$0xff]
    %v29 = vld [vmem:[%s1 + $0x30] sm:$0xff]
    %v30 = vld [vmem:[%s1 + $0x38] sm:$0xff]
    %v31 = vld [vmem:[%s1 + $0x40] sm:$0xff]
    %v32 = vld [vmem:[%s1 + $0x48] sm:$0xff]
    %v33 = vld [vmem:[%s1 + $0x50] sm:$0xff]
    %v34 = vld [vmem:[%s1 + $0x58] sm:$0xff]
    %v35 = vld [vmem:[%s1 + $0x60] sm:$0xff]
    %v36 = vld [vmem:[%s1 + $0x68] sm:$0xff]
    %v37 = vld [vmem:[%s1 + $0x70] sm:$0xff]
    %v38 = vld [vmem:[%s1 + $0x78] sm:$0xff]
    %vm39 = vcmask 523264
    %v41 = vsel %vm39, %v21, 0
    %v44 = vsel %vm39, %v22, 0
    %46 = vmatprep.subr.mxu0 %v24
    %47 = vmatpush1.msra.mxu0 %v23
    %48 = vmatprep.subr.mxu0 %v26
    %49 = vmatpush1.msra.mxu0 %v25
    %50 = vmatprep.subr.mxu0 %v28
    %51 = vmatpush1.msra.mxu0 %v27
    %52 = vmatprep.subr.mxu0 %v30
    %53 = vmatpush1.msra.mxu0 %v29
    %54 = vmatprep.subr.mxu0 %v32
    %55 = vmatpush1.msra.mxu0 %v31
    %56 = vmatprep.subr.mxu0 %v34
    %57 = vmatpush1.msra.mxu0 %v33
    %58 = vmatprep.subr.mxu0 %v36
    %59 = vmatpush1.msra.mxu0 %v35
    %60 = vmatprep.subr.mxu0 %v38
    %61 = vmatpush1.msra.mxu0 %v37
    %62 = vmatprep.subr.mxu0 0.0
    %63 = vmatpush1.msra.mxu0 0.0
    %64 = vmatprep.subr.mxu0 0.0
    %65 = vmatpush1.msra.mxu0 0.0
    %66 = vmatprep.subr.mxu0 0.0
    %67 = vmatpush1.msra.mxu0 0.0
    %68 = vmatprep.subr.mxu0 0.0
    %69 = vmatpush1.msra.mxu0 0.0
    %70 = vmatprep.subr.mxu0 0.0
    %71 = vmatpush1.msra.mxu0 0.0
    %72 = vmatprep.subr.mxu0 0.0
    %73 = vmatpush1.msra.mxu0 0.0
    %74 = vmatprep.subr.mxu0 0.0
    %75 = vmatpush1.msra.mxu0 0.0
    %76 = vmatprep.subr.mxu0 0.0
    %77 = vmatpush1.msra.mxu0 0.0
    %78 = vmatprep.subr.mxu0 0.0
    %79 = vmatpush1.msra.mxu0 0.0
    %80 = vmatprep.subr.mxu0 0.0
    %81 = vmatpush1.msra.mxu0 0.0
    %82 = vmatprep.subr.mxu0 0.0
    %83 = vmatpush1.msra.mxu0 0.0
    %84 = vmatprep.subr.mxu0 0.0
    %85 = vmatpush1.msra.mxu0 0.0
    %86 = vmatprep.subr.mxu0 0.0
    %87 = vmatpush1.msra.mxu0 0.0
    %88 = vmatprep.subr.mxu0 0.0
    %89 = vmatpush1.msra.mxu0 0.0
    %90 = vmatprep.subr.mxu0 0.0
    %91 = vmatpush1.msra.mxu0 0.0
    %92 = vmatprep.subr.mxu0 0.0
    %93 = vmatpush1.msra.mxu0 0.0
    %94 = vmatprep.subr.mxu0 0.0
    %95 = vmatpush1.msra.mxu0 0.0
    %96 = vmatprep.subr.mxu0 0.0
    %97 = vmatpush1.msra.mxu0 0.0
    %98 = vmatprep.subr.mxu0 0.0
    %99 = vmatpush1.msra.mxu0 0.0
    %100 = vmatprep.subr.mxu0 0.0
    %101 = vmatpush1.msra.mxu0 0.0
    %102 = vmatprep.subr.mxu0 0.0
    %103 = vmatpush1.msra.mxu0 0.0
    %104 = vmatprep.subr.mxu0 0.0
    %105 = vmatpush1.msra.mxu0 0.0
    %106 = vmatprep.subr.mxu0 0.0
    %107 = vmatpush1.msra.mxu0 0.0
    %108 = vmatprep.subr.mxu0 0.0
    %109 = vmatpush1.msra.mxu0 0.0
    %110 = vmatprep.mubr.f32.mxu0 0.0
    %111 = vmatmul.mubr.f32.gmra.mrb[0].mxu0 %v41
    %v112 = vpop.f32.mrb[0].mxu0
    %v113 = vadd.f32 0.0, %v112
    %v114 = vpop.f32.mrb[0].mxu0
    %v115 = vadd.f32 0.0, %v114
    %116 = vmatprep.mubr.f32.mxu0 0.0
    %117 = vmatmul.mubr.f32.gmra.mrb[0].mxu0 %v44
    %v118 = vpop.f32.mrb[0].mxu0
    %v119 = vadd.f32 0.0, %v118
    %v120 = vpop.f32.mrb[0].mxu0
    %v121 = vadd.f32 0.0, %v120
    %122 = vdwg.mxu0
    %v123 = vld [vmem:[%s2] sm:$0xff]
    %v124 = vld [vmem:[%s2 + $0x8] sm:$0xff]
    %v125 = vld [vmem:[%s2 + $0x10] sm:$0xff]
    %v126 = vld [vmem:[%s2 + $0x18] sm:$0xff]
    %v127 = vld [vmem:[%s2 + $0x20] sm:$0xff]
    %v128 = vld [vmem:[%s2 + $0x28] sm:$0xff]
    %v129 = vld [vmem:[%s2 + $0x30] sm:$0xff]
    %v130 = vld [vmem:[%s2 + $0x38] sm:$0xff]
    %v131 = vld [vmem:[%s2 + $0x40] sm:$0xff]
    %v132 = vld [vmem:[%s2 + $0x48] sm:$0xff]
    %v133 = vld [vmem:[%s2 + $0x50] sm:$0xff]
    %v134 = vld [vmem:[%s2 + $0x58] sm:$0xff]
    %v135 = vld [vmem:[%s2 + $0x60] sm:$0xff]
    %v136 = vld [vmem:[%s2 + $0x68] sm:$0xff]
    %v137 = vld [vmem:[%s2 + $0x70] sm:$0xff]
    %v138 = vld [vmem:[%s2 + $0x78] sm:$0xff]
    %139 = vmatprep.subr.mxu0 %v124
    %140 = vmatpush1.msra.mxu0 %v123
    %141 = vmatprep.subr.mxu0 %v126
    %142 = vmatpush1.msra.mxu0 %v125
    %143 = vmatprep.subr.mxu0 %v128
    %144 = vmatpush1.msra.mxu0 %v127
    %145 = vmatprep.subr.mxu0 %v130
    %146 = vmatpush1.msra.mxu0 %v129
    %147 = vmatprep.subr.mxu0 %v132
    %148 = vmatpush1.msra.mxu0 %v131
    %149 = vmatprep.subr.mxu0 %v134
    %150 = vmatpush1.msra.mxu0 %v133
    %151 = vmatprep.subr.mxu0 %v136
    %152 = vmatpush1.msra.mxu0 %v135
    %153 = vmatprep.subr.mxu0 %v138
    %154 = vmatpush1.msra.mxu0 %v137
    %155 = vmatprep.subr.mxu0 0.0
    %156 = vmatpush1.msra.mxu0 0.0
    %157 = vmatprep.subr.mxu0 0.0
    %158 = vmatpush1.msra.mxu0 0.0
    %159 = vmatprep.subr.mxu0 0.0
    %160 = vmatpush1.msra.mxu0 0.0
    %161 = vmatprep.subr.mxu0 0.0
    %162 = vmatpush1.msra.mxu0 0.0
    %163 = vmatprep.subr.mxu0 0.0
    %164 = vmatpush1.msra.mxu0 0.0
    %165 = vmatprep.subr.mxu0 0.0
    %166 = vmatpush1.msra.mxu0 0.0
    %167 = vmatprep.subr.mxu0 0.0
    %168 = vmatpush1.msra.mxu0 0.0
    %169 = vmatprep.subr.mxu0 0.0
    %170 = vmatpush1.msra.mxu0 0.0
    %171 = vmatprep.subr.mxu0 0.0
    %172 = vmatpush1.msra.mxu0 0.0
    %173 = vmatprep.subr.mxu0 0.0
    %174 = vmatpush1.msra.mxu0 0.0
    %175 = vmatprep.subr.mxu0 0.0
    %176 = vmatpush1.msra.mxu0 0.0
    %177 = vmatprep.subr.mxu0 0.0
    %178 = vmatpush1.msra.mxu0 0.0
    %179 = vmatprep.subr.mxu0 0.0
    %180 = vmatpush1.msra.mxu0 0.0
    %181 = vmatprep.subr.mxu0 0.0
    %182 = vmatpush1.msra.mxu0 0.0
    %183 = vmatprep.subr.mxu0 0.0
    %184 = vmatpush1.msra.mxu0 0.0
    %185 = vmatprep.subr.mxu0 0.0
    %186 = vmatpush1.msra.mxu0 0.0
    %187 = vmatprep.subr.mxu0 0.0
    %188 = vmatpush1.msra.mxu0 0.0
    %189 = vmatprep.subr.mxu0 0.0
    %190 = vmatpush1.msra.mxu0 0.0
    %191 = vmatprep.subr.mxu0 0.0
    %192 = vmatpush1.msra.mxu0 0.0
    %193 = vmatprep.subr.mxu0 0.0
    %194 = vmatpush1.msra.mxu0 0.0
    %195 = vmatprep.subr.mxu0 0.0
    %196 = vmatpush1.msra.mxu0 0.0
    %197 = vmatprep.subr.mxu0 0.0
    %198 = vmatpush1.msra.mxu0 0.0
    %199 = vmatprep.subr.mxu0 0.0
    %200 = vmatpush1.msra.mxu0 0.0
    %201 = vmatprep.subr.mxu0 0.0
    %202 = vmatpush1.msra.mxu0 0.0
    %203 = vmatprep.mubr.f32.mxu0 0.0
    %204 = vmatmul.mubr.f32.gmra.mrb[0].mxu0 %v41
    %v205 = vpop.f32.mrb[0].mxu0
    %v206 = vadd.f32 0.0, %v205
    %v207 = vpop.f32.mrb[0].mxu0
    %v208 = vadd.f32 0.0, %v207
    %209 = vmatprep.mubr.f32.mxu0 0.0
    %210 = vmatmul.mubr.f32.gmra.mrb[0].mxu0 %v44
    %v211 = vpop.f32.mrb[0].mxu0
    %v212 = vadd.f32 0.0, %v211
    %v213 = vpop.f32.mrb[0].mxu0
    %v214 = vadd.f32 0.0, %v213
    %215 = vdwg.mxu0
    %v216 = vxor.u32 %v113, 2147483648
    %v217 = vxor.u32 %v115, 2147483648
    %v218 = vxor.u32 %v119, 2147483648
    %v219 = vxor.u32 %v121, 2147483648
    %v220 = vmul.f32 %v216, 1.442695
    %v221 = vpow.pop %v220
    %v222 = vmul.f32 %v217, 1.442695
    %v223 = vpow.pop %v222
    %v224 = vmul.f32 %v218, 1.442695
    %v225 = vpow.pop %v224
    %v226 = vmul.f32 %v219, 1.442695
    %v227 = vpow.pop %v226
    %v228 = vadd.f32 %v221, 1.0
    %v229 = vadd.f32 %v223, 1.0
    %v230 = vadd.f32 %v225, 1.0
    %v231 = vadd.f32 %v227, 1.0
    %v232 = vrcp.pop %v228
    %v233 = vmul.f32 1.0, %v232
    %v234 = vrcp.pop %v229
    %v235 = vmul.f32 1.0, %v234
    %v236 = vrcp.pop %v230
    %v237 = vmul.f32 1.0, %v236
    %v238 = vrcp.pop %v231
    %v239 = vmul.f32 1.0, %v238
    %v240 = vmul.f32 %v113, %v233
    %v241 = vmul.f32 %v115, %v235
    %v242 = vmul.f32 %v119, %v237
    %v243 = vmul.f32 %v121, %v239
    %v244 = vmul.f32 %v240, %v206
    %v245 = vmul.f32 %v241, %v208
    %v246 = vmul.f32 %v242, %v212
    %v247 = vmul.f32 %v243, %v214
    %v248 = vld [vmem:[%s3] sm:$0xff]
    %v249 = vld [vmem:[%s3 + $0x8] sm:$0xff]
    %v250 = vld [vmem:[%s3 + $0x10] sm:$0xff]
    %v251 = vld [vmem:[%s3 + $0x18] sm:$0xff]
    %v252 = vld [vmem:[%s3 + $0x20] sm:$0xff]
    %v253 = vld [vmem:[%s3 + $0x28] sm:$0xff]
    %v254 = vld [vmem:[%s3 + $0x30] sm:$0xff]
    %v255 = vld [vmem:[%s3 + $0x38] sm:$0xff]
    %v256 = vld [vmem:[%s3 + $0x40] sm:$0xff]
    %v257 = vld [vmem:[%s3 + $0x48] sm:$0xff]
    %v258 = vld [vmem:[%s3 + $0x50] sm:$0xff]
    %v259 = vld [vmem:[%s3 + $0x58] sm:$0xff]
    %v260 = vld [vmem:[%s3 + $0x60] sm:$0xff]
    %v261 = vld [vmem:[%s3 + $0x68] sm:$0xff]
    %v262 = vld [vmem:[%s3 + $0x70] sm:$0xff]
    %v263 = vld [vmem:[%s3 + $0x78] sm:$0xff]
    %v264 = vld [vmem:[%s3 + $0x80] sm:$0xff]
    %v265 = vld [vmem:[%s3 + $0x88] sm:$0xff]
    %v266 = vld [vmem:[%s3 + $0x90] sm:$0xff]
    %v267 = vld [vmem:[%s3 + $0x98] sm:$0xff]
    %v268 = vld [vmem:[%s3 + $0xa0] sm:$0xff]
    %v269 = vld [vmem:[%s3 + $0xa8] sm:$0x3]
    %vm270 = vcmask 343040
    %v272 = vsel %vm270, %v245, 0
    %v275 = vsel %vm270, %v247, 0
    %vm277 = vcmask 1041408
    %v279 = vsel %vm277, %v269, 0
    %281 = vmatprep.subr.mxu0 0.0
    %282 = vmatpush1.msra.mxu0 %v248
    %283 = vmatprep.subr.mxu0 0.0
    %284 = vmatpush1.msra.mxu0 %v249
    %285 = vmatprep.subr.mxu0 0.0
    %286 = vmatpush1.msra.mxu0 %v250
    %287 = vmatprep.subr.mxu0 0.0
    %288 = vmatpush1.msra.mxu0 %v251
    %289 = vmatprep.subr.mxu0 0.0
    %290 = vmatpush1.msra.mxu0 %v252
    %291 = vmatprep.subr.mxu0 0.0
    %292 = vmatpush1.msra.mxu0 %v253
    %293 = vmatprep.subr.mxu0 0.0
    %294 = vmatpush1.msra.mxu0 %v254
    %295 = vmatprep.subr.mxu0 0.0
    %296 = vmatpush1.msra.mxu0 %v255
    %297 = vmatprep.subr.mxu0 0.0
    %298 = vmatpush1.msra.mxu0 %v256
    %299 = vmatprep.subr.mxu0 0.0
    %300 = vmatpush1.msra.mxu0 %v257
    %301 = vmatprep.subr.mxu0 0.0
    %302 = vmatpush1.msra.mxu0 %v258
    %303 = vmatprep.subr.mxu0 0.0
    %304 = vmatpush1.msra.mxu0 %v259
    %305 = vmatprep.subr.mxu0 0.0
    %306 = vmatpush1.msra.mxu0 %v260
    %307 = vmatprep.subr.mxu0 0.0
    %308 = vmatpush1.msra.mxu0 %v261
    %309 = vmatprep.subr.mxu0 0.0
    %310 = vmatpush1.msra.mxu0 %v262
    %311 = vmatprep.subr.mxu0 0.0
    %312 = vmatpush1.msra.mxu0 %v263
    %313 = vmatprep.subr.mxu0 0.0
    %314 = vmatpush1.msra.mxu0 %v264
    %315 = vmatprep.subr.mxu0 0.0
    %316 = vmatpush1.msra.mxu0 %v265
    %317 = vmatprep.subr.mxu0 0.0
    %318 = vmatpush1.msra.mxu0 %v266
    %319 = vmatprep.subr.mxu0 0.0
    %320 = vmatpush1.msra.mxu0 %v267
    %321 = vmatprep.subr.mxu0 0.0
    %322 = vmatpush1.msra.mxu0 %v268
    %323 = vmatprep.subr.mxu0 0.0
    %324 = vmatpush1.msra.mxu0 %v279
    %325 = vmatprep.subr.mxu0 0.0
    %326 = vmatpush1.msra.mxu0 0.0
    %327 = vmatprep.subr.mxu0 0.0
    %328 = vmatpush1.msra.mxu0 0.0
    %329 = vmatprep.subr.mxu0 0.0
    %330 = vmatpush1.msra.mxu0 0.0
    %331 = vmatprep.subr.mxu0 0.0
    %332 = vmatpush1.msra.mxu0 0.0
    %333 = vmatprep.subr.mxu0 0.0
    %334 = vmatpush1.msra.mxu0 0.0
    %335 = vmatprep.subr.mxu0 0.0
    %336 = vmatpush1.msra.mxu0 0.0
    %337 = vmatprep.subr.mxu0 0.0
    %338 = vmatpush1.msra.mxu0 0.0
    %339 = vmatprep.subr.mxu0 0.0
    %340 = vmatpush1.msra.mxu0 0.0
    %341 = vmatprep.subr.mxu0 0.0
    %342 = vmatpush1.msra.mxu0 0.0
    %343 = vmatprep.subr.mxu0 0.0
    %344 = vmatpush1.msra.mxu0 0.0
    %345 = vmatprep.mubr.f32.mxu0 %v272
    %346 = vmatmul.mubr.f32.gmra.mrb[0].mxu0 %v244
    %v347 = vpop.f32.mrb[0].mxu0
    %v348 = vadd.f32 %v21, %v347
    %v349 = vpop.f32.mrb[0].mxu0
    %350 = vmatprep.mubr.f32.mxu0 %v275
    %351 = vmatmul.mubr.f32.gmra.mrb[0].mxu0 %v246
    %v352 = vpop.f32.mrb[0].mxu0
    %v353 = vadd.f32 %v22, %v352
    %v354 = vpop.f32.mrb[0].mxu0
    %355 = vdwg.mxu0
    %s356 = scalar_lea.vmem %s1, 128
    %v357 = vld [vmem:[%s356] sm:$0xff]
    %v358 = vld [vmem:[%s356 + $0x8] sm:$0xff]
    %v359 = vld [vmem:[%s356 + $0x10] sm:$0xff]
    %v360 = vld [vmem:[%s356 + $0x18] sm:$0xff]
    %v361 = vld [vmem:[%s356 + $0x20] sm:$0xff]
    %v362 = vld [vmem:[%s356 + $0x28] sm:$0xff]
    %v363 = vld [vmem:[%s356 + $0x30] sm:$0xff]
    %v364 = vld [vmem:[%s356 + $0x38] sm:$0xff]
    %v365 = vld [vmem:[%s356 + $0x40] sm:$0xff]
    %v366 = vld [vmem:[%s356 + $0x48] sm:$0xff]
    %v367 = vld [vmem:[%s356 + $0x50] sm:$0xff]
    %v368 = vld [vmem:[%s356 + $0x58] sm:$0xff]
    %v369 = vld [vmem:[%s356 + $0x60] sm:$0xff]
    %v370 = vld [vmem:[%s356 + $0x68] sm:$0xff]
    %v371 = vld [vmem:[%s356 + $0x70] sm:$0xff]
    %v372 = vld [vmem:[%s356 + $0x78] sm:$0xff]
    %v374 = vsel %vm39, %v348, 0
    %v377 = vsel %vm39, %v353, 0
    %379 = vmatprep.subr.mxu0 %v358
    %380 = vmatpush1.msra.mxu0 %v357
    %381 = vmatprep.subr.mxu0 %v360
    %382 = vmatpush1.msra.mxu0 %v359
    %383 = vmatprep.subr.mxu0 %v362
    %384 = vmatpush1.msra.mxu0 %v361
    %385 = vmatprep.subr.mxu0 %v364
    %386 = vmatpush1.msra.mxu0 %v363
    %387 = vmatprep.subr.mxu0 %v366
    %388 = vmatpush1.msra.mxu0 %v365
    %389 = vmatprep.subr.mxu0 %v368
    %390 = vmatpush1.msra.mxu0 %v367
    %391 = vmatprep.subr.mxu0 %v370
    %392 = vmatpush1.msra.mxu0 %v369
    %393 = vmatprep.subr.mxu0 %v372
    %394 = vmatpush1.msra.mxu0 %v371
    %395 = vmatprep.subr.mxu0 0.0
    %396 = vmatpush1.msra.mxu0 0.0
    %397 = vmatprep.subr.mxu0 0.0
    %398 = vmatpush1.msra.mxu0 0.0
    %399 = vmatprep.subr.mxu0 0.0
    %400 = vmatpush1.msra.mxu0 0.0
    %401 = vmatprep.subr.mxu0 0.0
    %402 = vmatpush1.msra.mxu0 0.0
    %403 = vmatprep.subr.mxu0 0.0
    %404 = vmatpush1.msra.mxu0 0.0
    %405 = vmatprep.subr.mxu0 0.0
    %406 = vmatpush1.msra.mxu0 0.0
    %407 = vmatprep.subr.mxu0 0.0
    %408 = vmatpush1.msra.mxu0 0.0
    %409 = vmatprep.subr.mxu0 0.0
    %410 = vmatpush1.msra.mxu0 0.0
    %411 = vmatprep.subr.mxu0 0.0
    %412 = vmatpush1.msra.mxu0 0.0
    %413 = vmatprep.subr.mxu0 0.0
    %414 = vmatpush1.msra.mxu0 0.0
    %415 = vmatprep.subr.mxu0 0.0
    %416 = vmatpush1.msra.mxu0 0.0
    %417 = vmatprep.subr.mxu0 0.0
    %418 = vmatpush1.msra.mxu0 0.0
    %419 = vmatprep.subr.mxu0 0.0
    %420 = vmatpush1.msra.mxu0 0.0
    %421 = vmatprep.subr.mxu0 0.0
    %422 = vmatpush1.msra.mxu0 0.0
    %423 = vmatprep.subr.mxu0 0.0
    %424 = vmatpush1.msra.mxu0 0.0
    %425 = vmatprep.subr.mxu0 0.0
    %426 = vmatpush1.msra.mxu0 0.0
    %427 = vmatprep.subr.mxu0 0.0
    %428 = vmatpush1.msra.mxu0 0.0
    %429 = vmatprep.subr.mxu0 0.0
    %430 = vmatpush1.msra.mxu0 0.0
    %431 = vmatprep.subr.mxu0 0.0
    %432 = vmatpush1.msra.mxu0 0.0
    %433 = vmatprep.subr.mxu0 0.0
    %434 = vmatpush1.msra.mxu0 0.0
    %435 = vmatprep.subr.mxu0 0.0
    %436 = vmatpush1.msra.mxu0 0.0
    %437 = vmatprep.subr.mxu0 0.0
    %438 = vmatpush1.msra.mxu0 0.0
    %439 = vmatprep.subr.mxu0 0.0
    %440 = vmatpush1.msra.mxu0 0.0
    %441 = vmatprep.subr.mxu0 0.0
    %442 = vmatpush1.msra.mxu0 0.0
    %443 = vmatprep.mubr.f32.mxu0 0.0
    %444 = vmatmul.mubr.f32.gmra.mrb[0].mxu0 %v374
    %v445 = vpop.f32.mrb[0].mxu0
    %v446 = vadd.f32 0.0, %v445
    %v447 = vpop.f32.mrb[0].mxu0
    %v448 = vadd.f32 0.0, %v447
    %449 = vmatprep.mubr.f32.mxu0 0.0
    %450 = vmatmul.mubr.f32.gmra.mrb[0].mxu0 %v377
    %v451 = vpop.f32.mrb[0].mxu0
    %v452 = vadd.f32 0.0, %v451
    %v453 = vpop.f32.mrb[0].mxu0
    %v454 = vadd.f32 0.0, %v453
    %455 = vdwg.mxu0
    %s456 = scalar_lea.vmem %s2, 128
    %v457 = vld [vmem:[%s456] sm:$0xff]
    %v458 = vld [vmem:[%s456 + $0x8] sm:$0xff]
    %v459 = vld [vmem:[%s456 + $0x10] sm:$0xff]
    %v460 = vld [vmem:[%s456 + $0x18] sm:$0xff]
    %v461 = vld [vmem:[%s456 + $0x20] sm:$0xff]
    %v462 = vld [vmem:[%s456 + $0x28] sm:$0xff]
    %v463 = vld [vmem:[%s456 + $0x30] sm:$0xff]
    %v464 = vld [vmem:[%s456 + $0x38] sm:$0xff]
    %v465 = vld [vmem:[%s456 + $0x40] sm:$0xff]
    %v466 = vld [vmem:[%s456 + $0x48] sm:$0xff]
    %v467 = vld [vmem:[%s456 + $0x50] sm:$0xff]
    %v468 = vld [vmem:[%s456 + $0x58] sm:$0xff]
    %v469 = vld [vmem:[%s456 + $0x60] sm:$0xff]
    %v470 = vld [vmem:[%s456 + $0x68] sm:$0xff]
    %v471 = vld [vmem:[%s456 + $0x70] sm:$0xff]
    %v472 = vld [vmem:[%s456 + $0x78] sm:$0xff]
    %473 = vmatprep.subr.mxu0 %v458
    %474 = vmatpush1.msra.mxu0 %v457
    %475 = vmatprep.subr.mxu0 %v460
    %476 = vmatpush1.msra.mxu0 %v459
    %477 = vmatprep.subr.mxu0 %v462
    %478 = vmatpush1.msra.mxu0 %v461
    %479 = vmatprep.subr.mxu0 %v464
    %480 = vmatpush1.msra.mxu0 %v463
    %481 = vmatprep.subr.mxu0 %v466
    %482 = vmatpush1.msra.mxu0 %v465
    %483 = vmatprep.subr.mxu0 %v468
    %484 = vmatpush1.msra.mxu0 %v467
    %485 = vmatprep.subr.mxu0 %v470
    %486 = vmatpush1.msra.mxu0 %v469
    %487 = vmatprep.subr.mxu0 %v472
    %488 = vmatpush1.msra.mxu0 %v471
    %489 = vmatprep.subr.mxu0 0.0
    %490 = vmatpush1.msra.mxu0 0.0
    %491 = vmatprep.subr.mxu0 0.0
    %492 = vmatpush1.msra.mxu0 0.0
    %493 = vmatprep.subr.mxu0 0.0
    %494 = vmatpush1.msra.mxu0 0.0
    %495 = vmatprep.subr.mxu0 0.0
    %496 = vmatpush1.msra.mxu0 0.0
    %497 = vmatprep.subr.mxu0 0.0
    %498 = vmatpush1.msra.mxu0 0.0
    %499 = vmatprep.subr.mxu0 0.0
    %500 = vmatpush1.msra.mxu0 0.0
    %501 = vmatprep.subr.mxu0 0.0
    %502 = vmatpush1.msra.mxu0 0.0
    %503 = vmatprep.subr.mxu0 0.0
    %504 = vmatpush1.msra.mxu0 0.0
    %505 = vmatprep.subr.mxu0 0.0
    %506 = vmatpush1.msra.mxu0 0.0
    %507 = vmatprep.subr.mxu0 0.0
    %508 = vmatpush1.msra.mxu0 0.0
    %509 = vmatprep.subr.mxu0 0.0
    %510 = vmatpush1.msra.mxu0 0.0
    %511 = vmatprep.subr.mxu0 0.0
    %512 = vmatpush1.msra.mxu0 0.0
    %513 = vmatprep.subr.mxu0 0.0
    %514 = vmatpush1.msra.mxu0 0.0
    %515 = vmatprep.subr.mxu0 0.0
    %516 = vmatpush1.msra.mxu0 0.0
    %517 = vmatprep.subr.mxu0 0.0
    %518 = vmatpush1.msra.mxu0 0.0
    %519 = vmatprep.subr.mxu0 0.0
    %520 = vmatpush1.msra.mxu0 0.0
    %521 = vmatprep.subr.mxu0 0.0
    %522 = vmatpush1.msra.mxu0 0.0
    %523 = vmatprep.subr.mxu0 0.0
    %524 = vmatpush1.msra.mxu0 0.0
    %525 = vmatprep.subr.mxu0 0.0
    %526 = vmatpush1.msra.mxu0 0.0
    %527 = vmatprep.subr.mxu0 0.0
    %528 = vmatpush1.msra.mxu0 0.0
    %529 = vmatprep.subr.mxu0 0.0
    %530 = vmatpush1.msra.mxu0 0.0
    %531 = vmatprep.subr.mxu0 0.0
    %532 = vmatpush1.msra.mxu0 0.0
    %533 = vmatprep.subr.mxu0 0.0
    %534 = vmatpush1.msra.mxu0 0.0
    %535 = vmatprep.subr.mxu0 0.0
    %536 = vmatpush1.msra.mxu0 0.0
    %537 = vmatprep.mubr.f32.mxu0 0.0
    %538 = vmatmul.mubr.f32.gmra.mrb[0].mxu0 %v374
    %v539 = vpop.f32.mrb[0].mxu0
    %v540 = vadd.f32 0.0, %v539
    %v541 = vpop.f32.mrb[0].mxu0
    %v542 = vadd.f32 0.0, %v541
    %543 = vmatprep.mubr.f32.mxu0 0.0
    %544 = vmatmul.mubr.f32.gmra.mrb[0].mxu0 %v377
    %v545 = vpop.f32.mrb[0].mxu0
    %v546 = vadd.f32 0.0, %v545
    %v547 = vpop.f32.mrb[0].mxu0
    %v548 = vadd.f32 0.0, %v547
    %549 = vdwg.mxu0
    %v550 = vxor.u32 %v446, 2147483648
    %v551 = vxor.u32 %v448, 2147483648
    %v552 = vxor.u32 %v452, 2147483648
    %v553 = vxor.u32 %v454, 2147483648
    %v554 = vmul.f32 %v550, 1.442695
    %v555 = vpow.pop %v554
    %v556 = vmul.f32 %v551, 1.442695
    %v557 = vpow.pop %v556
    %v558 = vmul.f32 %v552, 1.442695
    %v559 = vpow.pop %v558
    %v560 = vmul.f32 %v553, 1.442695
    %v561 = vpow.pop %v560
    %v562 = vadd.f32 %v555, 1.0
    %v563 = vadd.f32 %v557, 1.0
    %v564 = vadd.f32 %v559, 1.0
    %v565 = vadd.f32 %v561, 1.0
    %v566 = vrcp.pop %v562
    %v567 = vmul.f32 1.0, %v566
    %v568 = vrcp.pop %v563
    %v569 = vmul.f32 1.0, %v568
    %v570 = vrcp.pop %v564
    %v571 = vmul.f32 1.0, %v570
    %v572 = vrcp.pop %v565
    %v573 = vmul.f32 1.0, %v572
    %v574 = vmul.f32 %v446, %v567
    %v575 = vmul.f32 %v448, %v569
    %v576 = vmul.f32 %v452, %v571
    %v577 = vmul.f32 %v454, %v573
    %v578 = vmul.f32 %v574, %v540
    %v579 = vmul.f32 %v575, %v542
    %v580 = vmul.f32 %v576, %v546
    %v581 = vmul.f32 %v577, %v548
    %s582 = scalar_lea.vmem %s3, 176
    %v583 = vld [vmem:[%s582] sm:$0xff]
    %v584 = vld [vmem:[%s582 + $0x8] sm:$0xff]
    %v585 = vld [vmem:[%s582 + $0x10] sm:$0xff]
    %v586 = vld [vmem:[%s582 + $0x18] sm:$0xff]
    %v587 = vld [vmem:[%s582 + $0x20] sm:$0xff]
    %v588 = vld [vmem:[%s582 + $0x28] sm:$0xff]
    %v589 = vld [vmem:[%s582 + $0x30] sm:$0xff]
    %v590 = vld [vmem:[%s582 + $0x38] sm:$0xff]
    %v591 = vld [vmem:[%s582 + $0x40] sm:$0xff]
    %v592 = vld [vmem:[%s582 + $0x48] sm:$0xff]
    %v593 = vld [vmem:[%s582 + $0x50] sm:$0xff]
    %v594 = vld [vmem:[%s582 + $0x58] sm:$0xff]
    %v595 = vld [vmem:[%s582 + $0x60] sm:$0xff]
    %v596 = vld [vmem:[%s582 + $0x68] sm:$0xff]
    %v597 = vld [vmem:[%s582 + $0x70] sm:$0xff]
    %v598 = vld [vmem:[%s582 + $0x78] sm:$0xff]
    %v599 = vld [vmem:[%s582 + $0x80] sm:$0xff]
    %v600 = vld [vmem:[%s582 + $0x88] sm:$0xff]
    %v601 = vld [vmem:[%s582 + $0x90] sm:$0xff]
    %v602 = vld [vmem:[%s582 + $0x98] sm:$0xff]
    %v603 = vld [vmem:[%s582 + $0xa0] sm:$0xff]
    %v604 = vld [vmem:[%s582 + $0xa8] sm:$0x3]
    %v606 = vsel %vm270, %v579, 0
    %v609 = vsel %vm270, %v581, 0
    %v612 = vsel %vm277, %v604, 0
    %614 = vmatprep.subr.mxu0 0.0
    %615 = vmatpush1.msra.mxu0 %v583
    %616 = vmatprep.subr.mxu0 0.0
    %617 = vmatpush1.msra.mxu0 %v584
    %618 = vmatprep.subr.mxu0 0.0
    %619 = vmatpush1.msra.mxu0 %v585
    %620 = vmatprep.subr.mxu0 0.0
    %621 = vmatpush1.msra.mxu0 %v586
    %622 = vmatprep.subr.mxu0 0.0
    %623 = vmatpush1.msra.mxu0 %v587
    %624 = vmatprep.subr.mxu0 0.0
    %625 = vmatpush1.msra.mxu0 %v588
    %626 = vmatprep.subr.mxu0 0.0
    %627 = vmatpush1.msra.mxu0 %v589
    %628 = vmatprep.subr.mxu0 0.0
    %629 = vmatpush1.msra.mxu0 %v590
    %630 = vmatprep.subr.mxu0 0.0
    %631 = vmatpush1.msra.mxu0 %v591
    %632 = vmatprep.subr.mxu0 0.0
    %633 = vmatpush1.msra.mxu0 %v592
    %634 = vmatprep.subr.mxu0 0.0
    %635 = vmatpush1.msra.mxu0 %v593
    %636 = vmatprep.subr.mxu0 0.0
    %637 = vmatpush1.msra.mxu0 %v594
    %638 = vmatprep.subr.mxu0 0.0
    %639 = vmatpush1.msra.mxu0 %v595
    %640 = vmatprep.subr.mxu0 0.0
    %641 = vmatpush1.msra.mxu0 %v596
    %642 = vmatprep.subr.mxu0 0.0
    %643 = vmatpush1.msra.mxu0 %v597
    %644 = vmatprep.subr.mxu0 0.0
    %645 = vmatpush1.msra.mxu0 %v598
    %646 = vmatprep.subr.mxu0 0.0
    %647 = vmatpush1.msra.mxu0 %v599
    %648 = vmatprep.subr.mxu0 0.0
    %649 = vmatpush1.msra.mxu0 %v600
    %650 = vmatprep.subr.mxu0 0.0
    %651 = vmatpush1.msra.mxu0 %v601
    %652 = vmatprep.subr.mxu0 0.0
    %653 = vmatpush1.msra.mxu0 %v602
    %654 = vmatprep.subr.mxu0 0.0
    %655 = vmatpush1.msra.mxu0 %v603
    %656 = vmatprep.subr.mxu0 0.0
    %657 = vmatpush1.msra.mxu0 %v612
    %658 = vmatprep.subr.mxu0 0.0
    %659 = vmatpush1.msra.mxu0 0.0
    %660 = vmatprep.subr.mxu0 0.0
    %661 = vmatpush1.msra.mxu0 0.0
    %662 = vmatprep.subr.mxu0 0.0
    %663 = vmatpush1.msra.mxu0 0.0
    %664 = vmatprep.subr.mxu0 0.0
    %665 = vmatpush1.msra.mxu0 0.0
    %666 = vmatprep.subr.mxu0 0.0
    %667 = vmatpush1.msra.mxu0 0.0
    %668 = vmatprep.subr.mxu0 0.0
    %669 = vmatpush1.msra.mxu0 0.0
    %670 = vmatprep.subr.mxu0 0.0
    %671 = vmatpush1.msra.mxu0 0.0
    %672 = vmatprep.subr.mxu0 0.0
    %673 = vmatpush1.msra.mxu0 0.0
    %674 = vmatprep.subr.mxu0 0.0
    %675 = vmatpush1.msra.mxu0 0.0
    %676 = vmatprep.subr.mxu0 0.0
    %677 = vmatpush1.msra.mxu0 0.0
    %678 = vmatprep.mubr.f32.mxu0 %v606
    %679 = vmatmul.mubr.f32.gmra.mrb[0].mxu0 %v578
    %v680 = vpop.f32.mrb[0].mxu0
    %v681 = vadd.f32 %v348, %v680
    %v682 = vpop.f32.mrb[0].mxu0
    %683 = vmatprep.mubr.f32.mxu0 %v609
    %684 = vmatmul.mubr.f32.gmra.mrb[0].mxu0 %v580
    %v685 = vpop.f32.mrb[0].mxu0
    %v686 = vadd.f32 %v353, %v685
    %v687 = vpop.f32.mrb[0].mxu0
    %688 = vdwg.mxu0
    %v689 = vsel %vm39, %v681, 0.0
    %690 = vadd.xlane.f32.xlu0 %v689
    %v691 = vpop.xlane.xlu0 %690
    %v692 = vsel %vm39, %v686, 0.0
    %693 = vadd.xlane.f32.xlu0 %v692
    %v694 = vpop.xlane.xlu0 %693
    %v695 = vrcp.pop 64.0
    %v696 = vmul.f32 %v691, %v695
    %v697 = vmul.f32 %v694, %v695
    %v698 = vsub.f32 %v681, %v696
    %v699 = vsub.f32 %v686, %v697
    %v700 = vmul.f32 %v698, %v698
    %v701 = vmul.f32 %v699, %v699
    %v702 = vsel %vm39, %v700, 0.0
    %703 = vadd.xlane.f32.xlu0 %v702
    %v704 = vpop.xlane.xlu0 %703
    %v705 = vsel %vm39, %v701, 0.0
    %706 = vadd.xlane.f32.xlu0 %v705
    %v707 = vpop.xlane.xlu0 %706
    %v708 = vmul.f32 %v704, %v695
    %v709 = vmul.f32 %v707, %v695
    %v710 = vadd.f32 %v708, 1e-05
    %v711 = vadd.f32 %v709, 1e-05
    %v712 = vrsqrt.pop %v710
    %v713 = vrsqrt.pop %v711
    %v714 = vmul.f32 %v698, %v712
    %v715 = vmul.f32 %v699, %v713
    %v716 = vld [vmem:[%s4] sm:$0x1]
    %v718 = vlaneseq
    %v719 = vshrl.u32 %v718, 7
    %v720 = vsub.s32 0, %v719
    %v721 = vrot.slane %v716, %v720
    %v723 = vmul.f32 %v714, %v721
    %v724 = vmul.f32 %v715, %v721
    %725 = vst.msk [vmem:[#allocation2] sm:$0xff] %vm39, %v723
    %726 = vst.msk [vmem:[#allocation2 + $0x8] sm:$0xff] %vm39, %v724
    // Predicated region
    $region22: #{tpu_custom_call.1} parent=1 // pred_check
      _
    $region23: #{tpu_custom_call.1} parent=1 // pred_check_branch
      %728 = sbr.rel (0) target = $region25
    $region24: #{tpu_custom_call.1} parent=1 // pred_region
      %s730 = ssub.s32 256, 256
      %731 = vsyncadd [#allocation3], %s730
      %s732 = sshll.u32 [#allocation2], 4
      %s733 = int_to_ptr.vmem [resolvable:$true] %s732
      %738 = dma.vmem_to_hbm [thread:$0]  %s733, 256, %s5, [#allocation3], 128, 128, 8
    $region25: #{tpu_custom_call.1} parent=1 // pred_fallthru
      _
    // Predicated region
    $region26: #{tpu_custom_call.1} parent=1 // pred_check
      _
    $region27: #{tpu_custom_call.1} parent=1 // pred_check_branch
      %740 = sbr.rel (0) target = $region29
    $region28: #{tpu_custom_call.1} parent=1 // pred_region
      %741 = dma.done [#allocation3], 256
    $region29: #{tpu_custom_call.1} parent=1 // pred_fallthru
      _
    %742 = vsyncpa [#allocation3], 1

</llo_original>
